<compile_context>
chip_gen: v5e
topology: v5e:2x2
jax: 0.10.0
libtpu: 0.0.40
codegen_flags: <defaults>
</compile_context>

<pallas_src>
import jax
import jax.numpy as jnp
from jax.experimental import pallas as pl
from jax.experimental.pallas import tpu as pltpu


def _round_up(x: int, m: int) -> int:
    return ((x + m - 1) // m) * m


def _choose_tm(m, cin, nout, out_itemsize, budget_bytes=24 * 1024 * 1024):
    """Largest row tile whose (double-buffered) working set fits a conservative budget."""
    tm = max(8, min(_round_up(m, 8), 1024))

    def est(t):
        return (2 * t * cin * 2                 # x block, bf16, double-buffered
                + 2 * cin * nout * 2            # resident W, bf16
                + 2 * t * nout * out_itemsize   # output block, double-buffered
                + t * nout * 4)                 # f32 intermediate headroom

    while tm > 8 and est(tm) > budget_bytes:
        tm = _round_up(tm // 2, 8)
    return tm


def _stats_kernel(x_ref, w_ref, sum_ref, ssq_ref):
    """Z = X @ W for this row tile; accumulate per-column sum and sum-of-squares."""
    @pl.when(pl.program_id(0) == 0)
    def _():
        sum_ref[...] = jnp.zeros_like(sum_ref)
        ssq_ref[...] = jnp.zeros_like(ssq_ref)

    z = jnp.dot(x_ref[...], w_ref[...], preferred_element_type=jnp.float32)
    sum_ref[...] += jnp.sum(z, axis=0, keepdims=True)
    ssq_ref[...] += jnp.sum(z * z, axis=0, keepdims=True)


def _deconv_bn_relu_kernel(x_ref, w_ref, scale_ref, shift_ref, o_ref):
    """Recompute Z = X @ W and apply the fused BN affine + ReLU (lane-dense store)."""
    z = jnp.dot(x_ref[...], w_ref[...], preferred_element_type=jnp.float32)
    o = jnp.maximum(z * scale_ref[...] + shift_ref[...], 0.0)
    o_ref[...] = o.astype(o_ref.dtype)


def deconv2d_bn_forward(x, w, b, gamma, beta, eps: float = 1e-5, tm=None):
    """Forward pass of deconv2d_bn (training-mode BatchNorm, as in a fresh module).

    x: (N, Cin, H, W)   w: (Cin, Cout, 2, 2)   b, gamma, beta: (Cout,)
    returns (N, Cout, 2H, 2W)
    """
    N, Cin, H, W = x.shape
    cin_w, Cout, KH, KW = w.shape
    assert cin_w == Cin and KH == 2 and KW == 2

    out_dtype = x.dtype
    M = N * H * W
    Cout_pad = _round_up(Cout, 32)       # -> Nout multiple of 128: lane-dense stores
    Nout = 4 * Cout_pad

    if tm is None:
        tm = _choose_tm(M, Cin, Nout, jnp.dtype(out_dtype).itemsize)
    tm = max(8, _round_up(min(tm, max(M, 8)), 8))
    M_pad = _round_up(M, tm)
    grid = (M_pad // tm,)

    # ---- host-side layout plumbing (X and W are the small tensors here) ----
    # NCHW -> (M, Cin) row-major over (n, i, j); bf16 MXU operands.
    x_mat = jnp.transpose(x, (0, 2, 3, 1)).reshape(M, Cin).astype(jnp.bfloat16)
    if M_pad != M:
        x_mat = jnp.pad(x_mat, ((0, M_pad - M), (0, 0)))  # zero rows: no tail masking needed
    # (Cin, Cout, 2, 2) -> (Cin, 2, 2, Cout_pad) -> (Cin, 4*Cout_pad),
    # column index = (di*2 + dj) * Cout_pad + co.
    w_mat = jnp.transpose(w, (0, 2, 3, 1))
    if Cout_pad != Cout:
        w_mat = jnp.pad(w_mat, ((0, 0), (0, 0), (0, 0), (0, Cout_pad - Cout)))
    w_mat = w_mat.reshape(Cin, Nout).astype(jnp.bfloat16)

    # Raise v5e's 16 MiB scoped default; leaves headroom on v7x (64 MiB physical).
    vmem_limit = 48 * 1024 * 1024

    # ---- pass 1: column sum / sum-of-squares of Z (Z never hits HBM) ----
    col_sum, col_ssq = pl.pallas_call(
        _stats_kernel,
        out_shape=(
            jax.ShapeDtypeStruct((1, Nout), jnp.float32),
            jax.ShapeDtypeStruct((1, Nout), jnp.float32),
        ),
        grid_spec=pltpu.PrefetchScalarGridSpec(
            num_scalar_prefetch=0,
            grid=grid,
            in_specs=[
                pl.BlockSpec((tm, Cin), lambda i: (i, 0)),
                pl.BlockSpec((Cin, Nout), lambda i: (0, 0)),
            ],
            out_specs=(
                pl.BlockSpec((1, Nout), lambda i: (0, 0)),   # resident accumulator
                pl.BlockSpec((1, Nout), lambda i: (0, 0)),   # resident accumulator
            ),
        ),
        compiler_params=pltpu.CompilerParams(
            dimension_semantics=("arbitrary",),
            vmem_limit_bytes=vmem_limit,
        ),
    )(x_mat, w_mat)
    # TODO(synk): on v7x (2 TensorCores) this stats pass could take a leading
    # size-2 "parallel" axis with per-core partial accumulators; kept single-core
    # since pass 1 only streams X (the small tensor) after the restructure.

    # ---- BatchNorm batch statistics (training-mode forward, biased variance) ----
    # The ConvTranspose2d bias shifts Z by a per-channel constant which BN's
    # mean subtraction cancels exactly, so it is dropped from both kernels.
    # TODO(synk): running_mean/running_var buffer updates (module state; would
    # need `+ b` added back into the reported running_mean) are not emitted.
    cnt = jnp.float32(4 * M)
    ch_sum = col_sum.reshape(4, Cout_pad).sum(axis=0)
    ch_ssq = col_ssq.reshape(4, Cout_pad).sum(axis=0)
    mean = ch_sum / cnt
    var = jnp.maximum(ch_ssq / cnt - mean * mean, 0.0)
    gamma_p = jnp.pad(gamma.astype(jnp.float32), (0, Cout_pad - Cout))
    beta_p = jnp.pad(beta.astype(jnp.float32), (0, Cout_pad - Cout))
    inv = gamma_p / jnp.sqrt(var + eps)
    scale = jnp.tile(inv, (4,)).reshape(1, Nout)
    shift = jnp.tile(beta_p - mean * inv, (4,)).reshape(1, Nout)

    # ---- pass 2: recompute Z, fused BN affine + ReLU, single HBM write ----
    out_mat = pl.pallas_call(
        _deconv_bn_relu_kernel,
        out_shape=jax.ShapeDtypeStruct((M_pad, Nout), out_dtype),
        grid_spec=pltpu.PrefetchScalarGridSpec(
            num_scalar_prefetch=0,
            grid=grid,
            in_specs=[
                pl.BlockSpec((tm, Cin), lambda i: (i, 0)),
                pl.BlockSpec((Cin, Nout), lambda i: (0, 0)),
                pl.BlockSpec((1, Nout), lambda i: (0, 0)),
                pl.BlockSpec((1, Nout), lambda i: (0, 0)),
            ],
            out_specs=pl.BlockSpec((tm, Nout), lambda i: (i, 0)),
        ),
        compiler_params=pltpu.CompilerParams(
            dimension_semantics=("parallel",),
            vmem_limit_bytes=vmem_limit,
        ),
    )(x_mat, w_mat, scale, shift)

    # (M, 4*Cout_pad) -> (N, H, W, 2, 2, Cout) -> NCHW (N, Cout, 2H, 2W).
    # The 2x2 sub-pixel interleave is not a rectangular BlockSpec, so this one
    # transpose stays as an XLA layout op.
    out = out_mat[:M].reshape(N, H, W, 2, 2, Cout_pad)[..., :Cout]
    out = jnp.transpose(out, (0, 5, 1, 3, 2, 4)).reshape(N, Cout, 2 * H, 2 * W)
    return out


def deconv2d_bn_ref(x, w, b, gamma, beta, eps: float = 1e-5):
    """Pure-JAX reference: ConvTranspose2d(k=2,s=2,bias) + BatchNorm2d(train) + ReLU."""
    N, Cin, H, W = x.shape
    Cout = w.shape[1]
    y = jnp.einsum("ncij,ckde->nkidje", x.astype(jnp.float32), w.astype(jnp.float32))
    y = y.reshape(N, Cout, 2 * H, 2 * W) + b.astype(jnp.float32)[None, :, None, None]
    mean = y.mean(axis=(0, 2, 3), keepdims=True)
    var = y.var(axis=(0, 2, 3), keepdims=True)
    yn = (y - mean) / jnp.sqrt(var + eps)
    yn = yn * gamma[None, :, None, None] + beta[None, :, None, None]
    return jnp.maximum(yn, 0.0)


if __name__ == "__main__":
    key = jax.random.PRNGKey(0)
    kx, kw, kb, kg, kbe = jax.random.split(key, 5)

    # Small shapes consistent with the module: batch=2, in_channels=4,
    # spatial 16x16, out_channels=8 -> output (2, 8, 32, 32).
    N, Cin, H, W, Cout = 2, 4, 16, 16, 8
    x = jax.random.normal(kx, (N, Cin, H, W), dtype=jnp.float32)
    w = 0.5 * jax.random.normal(kw, (Cin, Cout, 2, 2), dtype=jnp.float32)
    b = 0.1 * jax.random.normal(kb, (Cout,), dtype=jnp.float32)
    gamma = 1.0 + 0.1 * jax.random.normal(kg, (Cout,), dtype=jnp.float32)
    beta = 0.1 * jax.random.normal(kbe, (Cout,), dtype=jnp.float32)

    # tm=128 on the tiny demo exercises the multi-step accumulation path
    # (grid of 4); for production-size inputs the auto-derived tm applies.
    out = deconv2d_bn_forward(x, w, b, gamma, beta, tm=128)
    out = jax.block_until_ready(out)

    ref = jax.block_until_ready(deconv2d_bn_ref(x, w, b, gamma, beta))
    assert out.shape == (N, Cout, 2 * H, 2 * W), out.shape
    err = float(jnp.max(jnp.abs(out - ref)))
    # Output is BN-normalized (O(1)); tolerance covers bf16 MXU operands.
    assert err < 3e-2, err

    print("KERNEL_OK")
</pallas_src>

<mosaic_0001>
module attributes {stable_mosaic.version = 11 : i64} {
  func.func @_stats_kernel(%arg0: i32, %arg1: memref<128x4xbf16, #tpu.memory_space<vmem>>, %arg2: memref<4x128xbf16, #tpu.memory_space<vmem>>, %arg3: memref<1x128xf32, #tpu.memory_space<vmem>>, %arg4: memref<1x128xf32, #tpu.memory_space<vmem>>) attributes {dimension_semantics = [#tpu.dimension_semantics<arbitrary>], iteration_bounds = array<i64: 4>, scalar_prefetch = 0 : i64, scratch_operands = 0 : i64, tpu.core_type = #tpu.core_type<tc>, window_params = [{transform_indices = @transform_0, window_bounds = array<i64: 128, 4>}, {pipeline_mode = #tpu.pipeline_mode<synchronous>, transform_indices = @transform_1, window_bounds = array<i64: 4, 128>}, {pipeline_mode = #tpu.pipeline_mode<synchronous>, transform_indices = @transform_2, window_bounds = array<i64: 1, 128>}, {pipeline_mode = #tpu.pipeline_mode<synchronous>, transform_indices = @transform_3, window_bounds = array<i64: 1, 128>}]} {
    %c0_i32 = arith.constant 0 : i32
    %0 = arith.cmpi eq, %arg0, %c0_i32 : i32
    %1 = arith.extui %0 : i1 to i32
    %c0_i32_0 = arith.constant 0 : i32
    %2 = arith.cmpi ne, %1, %c0_i32_0 : i32
    scf.if %2 {
      %cst_14 = arith.constant 0.000000e+00 : f32
      %17 = vector.broadcast %cst_14 : f32 to vector<1x128xf32>
      %c0_15 = arith.constant 0 : index
      %c0_16 = arith.constant 0 : index
      %18 = vector.load %arg3[%c0_15, %c0_16] : memref<1x128xf32, #tpu.memory_space<vmem>>, vector<1x128xf32>
      tpu.vector_store %arg3[%c0_15, %c0_16], %17 {strides = array<i32>} : memref<1x128xf32, #tpu.memory_space<vmem>>, vector<1x128xf32>,
      %cst_17 = arith.constant 0.000000e+00 : f32
      %19 = vector.broadcast %cst_17 : f32 to vector<1x128xf32>
      %c0_18 = arith.constant 0 : index
      %c0_19 = arith.constant 0 : index
      %20 = vector.load %arg4[%c0_18, %c0_19] : memref<1x128xf32, #tpu.memory_space<vmem>>, vector<1x128xf32>
      tpu.vector_store %arg4[%c0_18, %c0_19], %19 {strides = array<i32>} : memref<1x128xf32, #tpu.memory_space<vmem>>, vector<1x128xf32>,
    } else {
    }
    %c0 = arith.constant 0 : index
    %c0_1 = arith.constant 0 : index
    %3 = vector.load %arg1[%c0, %c0_1] : memref<128x4xbf16, #tpu.memory_space<vmem>>, vector<128x4xbf16>
    %c0_2 = arith.constant 0 : index
    %c0_3 = arith.constant 0 : index
    %4 = vector.load %arg2[%c0_2, %c0_3] : memref<4x128xbf16, #tpu.memory_space<vmem>>, vector<4x128xbf16>
    %cst = arith.constant dense<0.000000e+00> : vector<128x128xf32>
    %5 = tpu.matmul %3, %4, %cst {dimension_numbers = #tpu.dot_dimension_numbers<[1], [0], [0], [1], [0, 0, 1, 1], [], []>} : vector<128x4xbf16>, vector<4x128xbf16>, vector<128x128xf32> -> vector<128x128xf32>
    %c0_4 = arith.constant 0 : index
    %c0_5 = arith.constant 0 : index
    %6 = vector.load %arg3[%c0_4, %c0_5] : memref<1x128xf32, #tpu.memory_space<vmem>>, vector<1x128xf32>
    %cst_6 = arith.constant dense<0.000000e+00> : vector<128xf32>
    %7 = vector.multi_reduction <add>, %5, %cst_6 [0] : vector<128x128xf32> to vector<128xf32>
    %8 = vector.shape_cast %7 : vector<128xf32> to vector<1x128xf32>
    %9 = arith.addf %6, %8 : vector<1x128xf32>
    %c0_7 = arith.constant 0 : index
    %c0_8 = arith.constant 0 : index
    %10 = vector.load %arg3[%c0_7, %c0_8] : memref<1x128xf32, #tpu.memory_space<vmem>>, vector<1x128xf32>
    tpu.vector_store %arg3[%c0_7, %c0_8], %9 {strides = array<i32>} : memref<1x128xf32, #tpu.memory_space<vmem>>, vector<1x128xf32>,
    %c0_9 = arith.constant 0 : index
    %c0_10 = arith.constant 0 : index
    %11 = vector.load %arg4[%c0_9, %c0_10] : memref<1x128xf32, #tpu.memory_space<vmem>>, vector<1x128xf32>
    %12 = arith.mulf %5, %5 : vector<128x128xf32>
    %cst_11 = arith.constant dense<0.000000e+00> : vector<128xf32>
    %13 = vector.multi_reduction <add>, %12, %cst_11 [0] : vector<128x128xf32> to vector<128xf32>
    %14 = vector.shape_cast %13 : vector<128xf32> to vector<1x128xf32>
    %15 = arith.addf %11, %14 : vector<1x128xf32>
    %c0_12 = arith.constant 0 : index
    %c0_13 = arith.constant 0 : index
    %16 = vector.load %arg4[%c0_12, %c0_13] : memref<1x128xf32, #tpu.memory_space<vmem>>, vector<1x128xf32>
    tpu.vector_store %arg4[%c0_12, %c0_13], %15 {strides = array<i32>} : memref<1x128xf32, #tpu.memory_space<vmem>>, vector<1x128xf32>,
    return
  }
  func.func @transform_0(%arg0: i32) -> (i32, i32) {
    %c0_i32 = arith.constant 0 : i32
    %c0_i32_0 = arith.constant 0 : i32
    return %arg0, %c0_i32 : i32, i32
  }
  func.func @transform_1(%arg0: i32) -> (i32, i32) {
    %c0_i32 = arith.constant 0 : i32
    %c0_i32_0 = arith.constant 0 : i32
    %c0_i32_1 = arith.constant 0 : i32
    return %c0_i32, %c0_i32_0 : i32, i32
  }
  func.func @transform_2(%arg0: i32) -> (i32, i32) {
    %c0_i32 = arith.constant 0 : i32
    %c0_i32_0 = arith.constant 0 : i32
    %c0_i32_1 = arith.constant 0 : i32
    return %c0_i32, %c0_i32_0 : i32, i32
  }
  func.func @transform_3(%arg0: i32) -> (i32, i32) {
    %c0_i32 = arith.constant 0 : i32
    %c0_i32_0 = arith.constant 0 : i32
    %c0_i32_1 = arith.constant 0 : i32
    return %c0_i32, %c0_i32_0 : i32, i32
  }
}

</mosaic_0001>

<llo_original>
// kernel: tpu_custom_call.1
$region0: #{tpu_custom_call.1}
  #allocation0 [shape = 'u32[]', space=smem, size = 0x4, offset = 0x4, fixed_abs, tag = 'smem constant byte address 0x4 - core index']
  #allocation1 [shape = 'u32[72,128]{1,0:T(1,128)}', space=vmem, size = 0x9000, scoped, tag = 'internal scratch']
  %s0 = inlined_call_operand.vmem [shape: bf16[512,4], index: 0, kind: input, shape index: {}]
  %s1 = inlined_call_operand.vmem [shape: bf16[4,128], index: 1, kind: input, shape index: {}]
  %s2 = inlined_call_operand.hbm [shape: f32[1,128], index: 2, kind: output, shape index: {0}]
  %s3 = inlined_call_operand.hbm [shape: f32[1,128], index: 3, kind: output, shape index: {1}]
  %4 = xla_tuple %s2, %s3
  %s5 = sld [smem:[#allocation0]]
  $region53: #{tpu_custom_call.1} parent=0
    _
  %s7 = ssub.s32 1, %s5
  %s8 = scalar_select 0, %s7, %s5
  $region1: #{tpu_custom_call.1} parent=0
    #allocation2 [shape = 'u8[512]{0}', space=vmem, size = 0x400, scoped, tag = 'output window, operand 0, single buffered']
    #allocation3 [shape = 's32[2]{0}', space=sflag, size = 0x8, scoped, tag = 'scoped memory for tpu_custom_call.1']
    #allocation4 [shape = 'u8[512]{0}', space=vmem, size = 0x400, scoped, tag = 'output window, operand 1, single buffered']
    #allocation5 [shape = 's32[1]{0}', space=sflag, size = 0x4, scoped, tag = 'scoped memory for tpu_custom_call.1']
    %9 = vsyncpa [#allocation3], 0
    %10 = vsyncpa [#allocation5], 0
    loop: start=0, step=1, limit=6
    $region2: #{tpu_custom_call.1} parent=1 // loop_pre_header
      _
    $region3: #{tpu_custom_call.1} parent=1 // loop_header
      %s12 = sphi 0, %s16
      %p13 = scmp.ge.s32.totalorder %s12, 6
      %s22 = sphi 0, %s24
      %s25 = sphi 0, %s22
      %s26 = sphi 0, %s25
      %s42 = sphi 0, %s26
      %s46 = sphi 0, %s46
      %s48 = sphi 0, %s46
      %s49 = sphi 0, %s48
      %s63 = sphi 0, %s49
      %s67 = sphi 0, %s67
      %s69 = sphi 0, %s67
      %s70 = sphi 0, %s69
      %s84 = sphi 0, %s70
      %s88 = sphi 0, %s88
      %s90 = sphi 0, %s88
      %s91 = sphi 0, %s90
      %s105 = sphi 0, %s91
    $region4: #{tpu_custom_call.1} parent=1 // loop_header_branch
      %15 = sbr.rel (%p13) target = $region8
    $region5: #{tpu_custom_call.1} parent=1 // loop_body
      %s17 = ssub.s32 %s12, 1
      %s18 = ssub.s32 %s12, 2
      %s19 = sadd.s32 %s12, 1
      %s20 = ssub.s32 %s12, %s19
      %p21 = scmp.eq.s32.totalorder %s20, 0
      %s23 = sadd.s32 %s22, 1
      %s24 = scalar_select %p21, %s22, %s23
      %p27 = pneg %p21
      %p28 = scmp.eq.s32.totalorder %s12, 3
      %p29 = por %p27, %p28
      %p30 = scmp.ne.s32.totalorder %s22, %s25
      %p31 = scmp.eq.s32.totalorder %s12, 0
      %p32 = por %p30, %p31
      %p33 = scmp.ne.s32.totalorder %s22, %s25
      %p34 = scmp.eq.s32.totalorder %s17, 3
      %p35 = por %p33, %p34
      %p36 = scmp.ne.s32.totalorder %s25, %s26
      %p37 = scmp.eq.s32.totalorder %s17, 0
      %p38 = por %p36, %p37
      %p39 = scmp.ne.s32.totalorder %s25, %s26
      %p40 = scmp.eq.s32.totalorder %s18, 3
      %p41 = por %p39, %p40
      %p43 = scmp.ne.s32.totalorder %s26, %s42
      %p44 = scmp.eq.s32.totalorder %s18, 0
      %p45 = por %p43, %p44
      %s47 = sadd.s32 %s46, 1
      %p50 = scmp.eq.s32.totalorder %s12, 3
      %p51 = scmp.ne.s32.totalorder %s46, %s48
      %p52 = scmp.eq.s32.totalorder %s12, 0
      %p53 = por %p51, %p52
      %p54 = scmp.ne.s32.totalorder %s46, %s48
      %p55 = scmp.eq.s32.totalorder %s17, 3
      %p56 = por %p54, %p55
      %p57 = scmp.ne.s32.totalorder %s48, %s49
      %p58 = scmp.eq.s32.totalorder %s17, 0
      %p59 = por %p57, %p58
      %p60 = scmp.ne.s32.totalorder %s48, %s49
      %p61 = scmp.eq.s32.totalorder %s18, 3
      %p62 = por %p60, %p61
      %p64 = scmp.ne.s32.totalorder %s49, %s63
      %p65 = scmp.eq.s32.totalorder %s18, 0
      %p66 = por %p64, %p65
      %s68 = sadd.s32 %s67, 1
      %p71 = scmp.eq.s32.totalorder %s12, 3
      %p72 = scmp.ne.s32.totalorder %s67, %s69
      %p73 = scmp.eq.s32.totalorder %s12, 0
      %p74 = por %p72, %p73
      %p75 = scmp.ne.s32.totalorder %s67, %s69
      %p76 = scmp.eq.s32.totalorder %s17, 3
      %p77 = por %p75, %p76
      %p78 = scmp.ne.s32.totalorder %s69, %s70
      %p79 = scmp.eq.s32.totalorder %s17, 0
      %p80 = por %p78, %p79
      %p81 = scmp.ne.s32.totalorder %s69, %s70
      %p82 = scmp.eq.s32.totalorder %s18, 3
      %p83 = por %p81, %p82
      %p85 = scmp.ne.s32.totalorder %s70, %s84
      %p86 = scmp.eq.s32.totalorder %s18, 0
      %p87 = por %p85, %p86
      %s89 = sadd.s32 %s88, 1
      %p92 = scmp.eq.s32.totalorder %s12, 3
      %p93 = scmp.ne.s32.totalorder %s88, %s90
      %p94 = scmp.eq.s32.totalorder %s12, 0
      %p95 = por %p93, %p94
      %p96 = scmp.ne.s32.totalorder %s88, %s90
      %p97 = scmp.eq.s32.totalorder %s17, 3
      %p98 = por %p96, %p97
      %p99 = scmp.ne.s32.totalorder %s90, %s91
      %p100 = scmp.eq.s32.totalorder %s17, 0
      %p101 = por %p99, %p100
      %p102 = scmp.ne.s32.totalorder %s90, %s91
      %p103 = scmp.eq.s32.totalorder %s18, 3
      %p104 = por %p102, %p103
      %p106 = scmp.ne.s32.totalorder %s91, %s105
      %p107 = scmp.eq.s32.totalorder %s18, 0
      %p108 = por %p106, %p107
      %p109 = scmp.le.s32.totalorder 1, %s12
      %p110 = scmp.lt.s32.totalorder %s12, 5
      %p111 = pnand %p109, %p110
      %p112 = pneg %p111
      // Predicated region
      $region9: #{tpu_custom_call.1} parent=5 // pred_check
        _
      $region10: #{tpu_custom_call.1} parent=5 // pred_check_branch
        %114 = sbr.rel (%p111) target = $region12
      $region11: #{tpu_custom_call.1} parent=5 // pred_region
        %s115 = ssub.s32 %s12, 1
        // Predicated region
        $region13: #{tpu_custom_call.1} parent=11 // pred_check
          %p116 = pneg %p59
        $region14: #{tpu_custom_call.1} parent=11 // pred_check_branch
          %118 = sbr.rel (%p116) target = $region16
        $region15: #{tpu_custom_call.1} parent=11 // pred_region
          _
        $region16: #{tpu_custom_call.1} parent=11 // pred_fallthru
          _
      $region12: #{tpu_custom_call.1} parent=5 // pred_fallthru
        _
      %p119 = scmp.lt.s32.totalorder %s12, 4
      // Predicated region
      $region17: #{tpu_custom_call.1} parent=5 // pred_check
        %p120 = pneg %p119
      $region18: #{tpu_custom_call.1} parent=5 // pred_check_branch
        %122 = sbr.rel (%p120) target = $region20
      $region19: #{tpu_custom_call.1} parent=5 // pred_region
        // Predicated region
        $region21: #{tpu_custom_call.1} parent=19 // pred_check
          %p123 = pneg %p32
        $region22: #{tpu_custom_call.1} parent=19 // pred_check_branch
          %125 = sbr.rel (%p123) target = $region24
        $region23: #{tpu_custom_call.1} parent=19 // pred_region
          %s126 = smul.u32 16, %s12
          %p127 = scmp.lt.s32.totalorder %s126, 63
          %s128 = scalar_select %p127, %s126, 63
          %s129 = smul.addr %s128, 4
          %s130 = scalar_lea.vmem %s0, %s129
          %s131 = smul.u32 16, %s12
        $region24: #{tpu_custom_call.1} parent=19 // pred_fallthru
          _
      $region20: #{tpu_custom_call.1} parent=5 // pred_fallthru
        _
      %p132 = scmp.le.s32.totalorder 1, %s12
      %p133 = scmp.lt.s32.totalorder %s12, 5
      %p134 = pnand %p132, %p133
      %p135 = pneg %p134
      // Predicated region
      $region25: #{tpu_custom_call.1} parent=5 // pred_check
        _
      $region26: #{tpu_custom_call.1} parent=5 // pred_check_branch
        %137 = sbr.rel (%p134) target = $region28
      $region27: #{tpu_custom_call.1} parent=5 // pred_region
        %s138 = ssub.s32 %s12, 1
        %s139 = smul.u32 16, %s17
        %p140 = scmp.lt.s32.totalorder %s139, 63
        %s141 = scalar_select %p140, %s139, 63
        %s142 = smul.addr %s141, 4
        %s143 = scalar_lea.vmem %s0, %s142
        %p144 = pneg %p38
        %p145 = pneg %p35
        %p146 = pneg %p59
        %p147 = pneg %p56
        %p148 = pneg %p80
        %p149 = pneg %p77
        %p150 = pneg %p101
        %p151 = pneg %p98
        %s152 = smul.u32 16, %s17
        %p153 = scmp.lt.s32.totalorder %s152, 63
        %s154 = scalar_select %p153, %s152, 63
        %s155 = smul.addr %s154, 4
        %s156 = scalar_lea.vmem %s0, %s155
        %s157 = smul.u32 16, %s17
        %p159 = scmp.eq.s32.totalorder %s17, 0
        // Predicated region
        $region29: #{tpu_custom_call.1} parent=27 // pred_check
          %p160 = pneg %p159
        $region30: #{tpu_custom_call.1} parent=27 // pred_check_branch
          %162 = sbr.rel (%p160) target = $region32
        $region31: #{tpu_custom_call.1} parent=27 // pred_region
          %163 = vst [vmem:[#allocation2] sm:$0x1] 0.0
          %164 = vst [vmem:[#allocation4] sm:$0x1] 0.0
        $region32: #{tpu_custom_call.1} parent=27 // pred_fallthru
          _
        %v165 = vld [vmem:[%s156] sm:$0xf]
        %v166 = vld [vmem:[%s156 + $0x4] sm:$0xf]
        %v167 = vld [vmem:[%s156 + $0x8] sm:$0xf]
        %v168 = vld [vmem:[%s156 + $0xc] sm:$0xf]
        %v169 = vld [vmem:[%s156 + $0x10] sm:$0xf]
        %v170 = vld [vmem:[%s156 + $0x14] sm:$0xf]
        %v171 = vld [vmem:[%s156 + $0x18] sm:$0xf]
        %v172 = vld [vmem:[%s156 + $0x1c] sm:$0xf]
        %v173 = vld [vmem:[%s156 + $0x20] sm:$0xf]
        %v174 = vld [vmem:[%s156 + $0x24] sm:$0xf]
        %v175 = vld [vmem:[%s156 + $0x28] sm:$0xf]
        %v176 = vld [vmem:[%s156 + $0x2c] sm:$0xf]
        %v177 = vld [vmem:[%s156 + $0x30] sm:$0xf]
        %v178 = vld [vmem:[%s156 + $0x34] sm:$0xf]
        %v179 = vld [vmem:[%s156 + $0x38] sm:$0xf]
        %v180 = vld [vmem:[%s156 + $0x3c] sm:$0xf]
        %v181 = vld [vmem:[%s1] sm:$0x3]
        %v198 = vunpack.c.l.b16 %v165
        %v199 = vunpack.c.l.b16 %v166
        %v200 = vunpack.c.l.b16 %v167
        %v201 = vunpack.c.l.b16 %v168
        %v202 = vunpack.c.l.b16 %v169
        %v203 = vunpack.c.l.b16 %v170
        %v204 = vunpack.c.l.b16 %v171
        %v205 = vunpack.c.l.b16 %v172
        %v206 = vunpack.c.l.b16 %v173
        %v207 = vunpack.c.l.b16 %v174
        %v208 = vunpack.c.l.b16 %v175
        %v209 = vunpack.c.l.b16 %v176
        %v210 = vunpack.c.l.b16 %v177
        %v211 = vunpack.c.l.b16 %v178
        %v212 = vunpack.c.l.b16 %v179
        %v213 = vunpack.c.l.b16 %v180
        %v214 = vpack.c.b16 %v199, %v198
        %v215 = vpack.c.b16 %v201, %v200
        %v216 = vpack.c.b16 %v203, %v202
        %v217 = vpack.c.b16 %v205, %v204
        %v218 = vpack.c.b16 %v207, %v206
        %v219 = vpack.c.b16 %v209, %v208
        %v220 = vpack.c.b16 %v211, %v210
        %v221 = vpack.c.b16 %v213, %v212
        %vm222 = vcmask 31744
        %v224 = vsel %vm222, %v214, 0
        %v227 = vsel %vm222, %v215, 0
        %v230 = vsel %vm222, %v216, 0
        %v233 = vsel %vm222, %v217, 0
        %v236 = vsel %vm222, %v218, 0
        %v239 = vsel %vm222, %v219, 0
        %v242 = vsel %vm222, %v220, 0
        %v245 = vsel %vm222, %v221, 0
        %vm247 = vcmask 1041408
        %v249 = vsel %vm247, %v181, 0
        %251 = vmatpush.bf16.msra.mxu0 0
        %252 = vmatpush.bf16.msra.mxu0 0
        %253 = vmatpush.bf16.msra.mxu0 0
        %254 = vmatpush.bf16.msra.mxu0 0
        %255 = vmatpush.bf16.msra.mxu0 0
        %256 = vmatpush.bf16.msra.mxu0 0
        %257 = vmatpush.bf16.msra.mxu0 0
        %258 = vmatpush.bf16.msra.mxu0 %v249
        %259 = vmatmul.bf16.gmra.mxu0 %v224
        %v260 = vpop.f32.mrf.mxu0
        %v261 = vadd.f32 0.0, %v260
        %v262 = vpop.f32.mrf.mxu0
        %v263 = vadd.f32 0.0, %v262
        %264 = vmatmul.bf16.gmra.mxu0 %v227
        %v265 = vpop.f32.mrf.mxu0
        %v266 = vadd.f32 0.0, %v265
        %v267 = vpop.f32.mrf.mxu0
        %v268 = vadd.f32 0.0, %v267
        %269 = vmatmul.bf16.gmra.mxu0 %v230
        %v270 = vpop.f32.mrf.mxu0
        %v271 = vadd.f32 0.0, %v270
        %v272 = vpop.f32.mrf.mxu0
        %v273 = vadd.f32 0.0, %v272
        %274 = vmatmul.bf16.gmra.mxu0 %v233
        %v275 = vpop.f32.mrf.mxu0
        %v276 = vadd.f32 0.0, %v275
        %v277 = vpop.f32.mrf.mxu0
        %v278 = vadd.f32 0.0, %v277
        %279 = vmatmul.bf16.gmra.mxu0 %v236
        %v280 = vpop.f32.mrf.mxu0
        %v281 = vadd.f32 0.0, %v280
        %v282 = vpop.f32.mrf.mxu0
        %v283 = vadd.f32 0.0, %v282
        %284 = vmatmul.bf16.gmra.mxu0 %v239
        %v285 = vpop.f32.mrf.mxu0
        %v286 = vadd.f32 0.0, %v285
        %v287 = vpop.f32.mrf.mxu0
        %v288 = vadd.f32 0.0, %v287
        %289 = vmatmul.bf16.gmra.mxu0 %v242
        %v290 = vpop.f32.mrf.mxu0
        %v291 = vadd.f32 0.0, %v290
        %v292 = vpop.f32.mrf.mxu0
        %v293 = vadd.f32 0.0, %v292
        %294 = vmatmul.bf16.gmra.mxu0 %v245
        %v295 = vpop.f32.mrf.mxu0
        %v296 = vadd.f32 0.0, %v295
        %v297 = vpop.f32.mrf.mxu0
        %v298 = vadd.f32 0.0, %v297
        %299 = vdwg.mxu0
        %v300 = vld [vmem:[#allocation2] sm:$0x1]
        %v301 = vadd.f32 %v261, %v263
        %v302 = vadd.f32 %v301, %v266
        %v303 = vadd.f32 %v302, %v268
        %v304 = vadd.f32 %v303, %v271
        %v305 = vadd.f32 %v304, %v273
        %v306 = vadd.f32 %v305, %v276
        %v307 = vadd.f32 %v306, %v278
        %v308 = vadd.f32 %v307, %v281
        %v309 = vadd.f32 %v308, %v283
        %v310 = vadd.f32 %v309, %v286
        %v311 = vadd.f32 %v310, %v288
        %v312 = vadd.f32 %v311, %v291
        %v313 = vadd.f32 %v312, %v293
        %v314 = vadd.f32 %v313, %v296
        %v315 = vadd.f32 %v314, %v298
        %v316 = vrot.slane %v315, 4
        %v317 = vadd.f32 %v315, %v316
        %v318 = vrot.slane %v317, 2
        %v319 = vadd.f32 %v317, %v318
        %v320 = vrot.slane %v319, 1
        %v321 = vadd.f32 %v319, %v320
        %v322 = vadd.f32 %v300, %v321
        %323 = vst [vmem:[#allocation2] sm:$0x1] %v322
        %v324 = vld [vmem:[#allocation4] sm:$0x1]
        %v325 = vmul.f32 %v261, %v261
        %v326 = vmul.f32 %v263, %v263
        %v327 = vmul.f32 %v266, %v266
        %v328 = vmul.f32 %v268, %v268
        %v329 = vmul.f32 %v271, %v271
        %v330 = vmul.f32 %v273, %v273
        %v331 = vmul.f32 %v276, %v276
        %v332 = vmul.f32 %v278, %v278
        %v333 = vmul.f32 %v281, %v281
        %v334 = vmul.f32 %v283, %v283
        %v335 = vmul.f32 %v286, %v286
        %v336 = vmul.f32 %v288, %v288
        %v337 = vmul.f32 %v291, %v291
        %v338 = vmul.f32 %v293, %v293
        %v339 = vmul.f32 %v296, %v296
        %v340 = vmul.f32 %v298, %v298
        %v341 = vadd.f32 %v325, %v326
        %v342 = vadd.f32 %v341, %v327
        %v343 = vadd.f32 %v342, %v328
        %v344 = vadd.f32 %v343, %v329
        %v345 = vadd.f32 %v344, %v330
        %v346 = vadd.f32 %v345, %v331
        %v347 = vadd.f32 %v346, %v332
        %v348 = vadd.f32 %v347, %v333
        %v349 = vadd.f32 %v348, %v334
        %v350 = vadd.f32 %v349, %v335
        %v351 = vadd.f32 %v350, %v336
        %v352 = vadd.f32 %v351, %v337
        %v353 = vadd.f32 %v352, %v338
        %v354 = vadd.f32 %v353, %v339
        %v355 = vadd.f32 %v354, %v340
        %v356 = vrot.slane %v355, 4
        %v357 = vadd.f32 %v355, %v356
        %v358 = vrot.slane %v357, 2
        %v359 = vadd.f32 %v357, %v358
        %v360 = vrot.slane %v359, 1
        %v361 = vadd.f32 %v359, %v360
        %v362 = vadd.f32 %v324, %v361
        %363 = vst [vmem:[#allocation4] sm:$0x1] %v362
        // Predicated region
        $region33: #{tpu_custom_call.1} parent=27 // pred_check
          %p364 = pneg %p77
        $region34: #{tpu_custom_call.1} parent=27 // pred_check_branch
          %366 = sbr.rel (%p364) target = $region36
        $region35: #{tpu_custom_call.1} parent=27 // pred_region
          %368 = vsyncadd [#allocation3], 0
          %s370 = sshll.u32 [#allocation2], 4
          %s371 = int_to_ptr.vmem [resolvable:$true] %s370
          %s372 = sshll.u32 %s2, 4
          %s373 = int_to_ptr.hbm [resolvable:$true] %s372
          %375 = dma.vmem_to_hbm [thread:$0]  %s371, 16, %s373, [#allocation3]
        $region36: #{tpu_custom_call.1} parent=27 // pred_fallthru
          _
        // Predicated region
        $region37: #{tpu_custom_call.1} parent=27 // pred_check
          %p376 = pneg %p98
        $region38: #{tpu_custom_call.1} parent=27 // pred_check_branch
          %378 = sbr.rel (%p376) target = $region40
        $region39: #{tpu_custom_call.1} parent=27 // pred_region
          %380 = vsyncadd [#allocation5], 0
          %s382 = sshll.u32 [#allocation4], 4
          %s383 = int_to_ptr.vmem [resolvable:$true] %s382
          %s384 = sshll.u32 %s3, 4
          %s385 = int_to_ptr.hbm [resolvable:$true] %s384
          %387 = dma.vmem_to_hbm [thread:$0]  %s383, 16, %s385, [#allocation5]
        $region40: #{tpu_custom_call.1} parent=27 // pred_fallthru
          _
        // Predicated region
        $region41: #{tpu_custom_call.1} parent=27 // pred_check
          %p388 = pneg %p77
        $region42: #{tpu_custom_call.1} parent=27 // pred_check_branch
          %390 = sbr.rel (%p388) target = $region44
        $region43: #{tpu_custom_call.1} parent=27 // pred_region
          %392 = dma.done [#allocation3], 16
        $region44: #{tpu_custom_call.1} parent=27 // pred_fallthru
          _
        // Predicated region
        $region45: #{tpu_custom_call.1} parent=27 // pred_check
          %p393 = pneg %p98
        $region46: #{tpu_custom_call.1} parent=27 // pred_check_branch
          %395 = sbr.rel (%p393) target = $region48
        $region47: #{tpu_custom_call.1} parent=27 // pred_region
          %397 = dma.done [#allocation5], 16
        $region48: #{tpu_custom_call.1} parent=27 // pred_fallthru
          _
      $region28: #{tpu_custom_call.1} parent=5 // pred_fallthru
        _
      %p398 = scmp.le.s32.totalorder 2, %s12
      // Predicated region
      $region49: #{tpu_custom_call.1} parent=5 // pred_check
        %p399 = pneg %p398
      $region50: #{tpu_custom_call.1} parent=5 // pred_check_branch
        %401 = sbr.rel (%p399) target = $region52
      $region51: #{tpu_custom_call.1} parent=5 // pred_region
        %s402 = ssub.s32 %s12, 2
      $region52: #{tpu_custom_call.1} parent=5 // pred_fallthru
        _
    $region6: #{tpu_custom_call.1} parent=1 // loop_footer
      %s16 = sadd.s32 1, %s12
    $region7: #{tpu_custom_call.1} parent=1 // loop_footer_branch
      %11 = sbr.rel target = $region3
    $region8: #{tpu_custom_call.1} parent=1 // loop_exit
      _
    %403 = vsyncpa [#allocation3], 1
    %s404 = scalar_lea.sflag [#allocation3], 1
    %405 = vsyncpa %s404, 1
    %406 = vsyncpa [#allocation5], 1

</llo_original>
